<compile_context>
chip_gen: v6e
topology: v6e:2x2x1
jax: 0.10.0
libtpu: 0.0.40
codegen_flags: <defaults>
</compile_context>

<pallas_src>
import jax
import jax.numpy as jnp
from jax import lax
from jax.experimental import pallas as pl
from jax.experimental.pallas import tpu as pltpu


def mlp_kernel(x_ref, w1_ref, b1_ref, w2_ref, b2_ref, o_ref):
    """y = relu(x @ W1^T + b1) @ W2^T + b2, with W1/W2 in PyTorch [out, in] layout."""
    x = x_ref[...]
    # fc1: contract x[B, Din] against w1[H, Din] along Din (no transposed copy).
    h = lax.dot_general(
        x, w1_ref[...],
        dimension_numbers=(((1,), (1,)), ((), ())),
        preferred_element_type=jnp.float32,
    )
    h = jnp.maximum(h + b1_ref[...], 0.0)          # bias broadcast over batch + ReLU
    # fc2: contract h[B, H] against w2[O_pad, H] along H.
    y = lax.dot_general(
        h, w2_ref[...],
        dimension_numbers=(((1,), (1,)), ((), ())),
        preferred_element_type=jnp.float32,
    )
    o_ref[...] = (y + b2_ref[...]).astype(o_ref.dtype)


def dummy_model_forward(x, w1, b1, w2, b2, *, block_batch=512):
    """x: [B, D_in]; w1: [H, D_in]; b1: [H]; w2: [O, H]; b2: [O] (PyTorch Linear layout)."""
    B, Din = x.shape
    H = w1.shape[0]
    O = w2.shape[0]

    # Lane-dense output: pad O up to a multiple of 128 so the output store is an
    # unmasked full-lane vst. Weight/bias padding is a one-time cost for static
    # weights; padded columns are zero and get sliced off below.
    O_pad = ((O + 127) // 128) * 128
    w2_p = jnp.pad(w2, ((0, O_pad - O), (0, 0)))
    b2_p = jnp.pad(b2, (0, O_pad - O))

    b1_2d = b1.reshape(1, H)
    b2_2d = b2_p.reshape(1, O_pad)
    out_dtype = jnp.float32

    if B <= block_batch:
        # Overhead-bound regime: single kernel invocation, everything resident
        # in VMEM, no grid / pipeline setup.
        out_p = pl.pallas_call(
            mlp_kernel,
            out_shape=jax.ShapeDtypeStruct((B, O_pad), out_dtype),
            in_specs=[pl.BlockSpec(memory_space=pltpu.MemorySpace.VMEM)] * 5,
            out_specs=pl.BlockSpec(memory_space=pltpu.MemorySpace.VMEM),
        )(x, w1, b1_2d, w2_p, b2_2d)
        return out_p[:, :O]

    # Large-batch regime: tile only the batch axis. Weights/biases are DMA'd
    # once and stay VMEM-resident across the whole grid; x / out tiles stream.
    TB = block_batch                      # multiple of 8 sublanes; fits v7x VMEM easily
    B_pad = ((B + TB - 1) // TB) * TB
    x_p = jnp.pad(x, ((0, B_pad - B), (0, 0))) if B_pad != B else x

    out_p = pl.pallas_call(
        mlp_kernel,
        out_shape=jax.ShapeDtypeStruct((B_pad, O_pad), out_dtype),
        grid=(B_pad // TB,),
        in_specs=[
            pl.BlockSpec((TB, Din), lambda i: (i, 0)),     # x: streams per tile
            pl.BlockSpec((H, Din), lambda i: (0, 0)),      # W1: resident
            pl.BlockSpec((1, H), lambda i: (0, 0)),        # b1: resident
            pl.BlockSpec((O_pad, H), lambda i: (0, 0)),    # W2 (padded): resident
            pl.BlockSpec((1, O_pad), lambda i: (0, 0)),    # b2 (padded): resident
        ],
        out_specs=pl.BlockSpec((TB, O_pad), lambda i: (i, 0)),
        compiler_params=pltpu.CompilerParams(
            dimension_semantics=("parallel",),             # megacore sharding on v7x
        ),
    )(x_p, w1, b1_2d, w2_p, b2_2d)
    return out_p[:B, :O]


if __name__ == "__main__":
    input_dim, hidden_dim, output_dim = 128, 64, 10
    batch = 8

    key = jax.random.PRNGKey(0)
    kx, kw1, kb1, kw2, kb2 = jax.random.split(key, 5)

    # Deterministic synthetic params (PyTorch Linear shapes: [out, in] weight, [out] bias).
    x = jax.random.normal(kx, (batch, input_dim), dtype=jnp.float32)
    w1 = jax.random.normal(kw1, (hidden_dim, input_dim), dtype=jnp.float32) * 0.05
    b1 = jax.random.normal(kb1, (hidden_dim,), dtype=jnp.float32) * 0.05
    w2 = jax.random.normal(kw2, (output_dim, hidden_dim), dtype=jnp.float32) * 0.05
    b2 = jax.random.normal(kb2, (output_dim,), dtype=jnp.float32) * 0.05

    # Small-batch (no-grid, all-VMEM) path.
    out = jax.block_until_ready(dummy_model_forward(x, w1, b1, w2, b2))
    ref = jnp.maximum(x @ w1.T + b1, 0.0) @ w2.T + b2
    assert out.shape == (batch, output_dim)
    assert jnp.allclose(out, ref, atol=1e-4, rtol=1e-4)

    # Batch-tiled path (weights VMEM-resident, batch axis parallel).
    big_B = 1024
    kx2 = jax.random.split(kx)[0]
    x_big = jax.random.normal(kx2, (big_B, input_dim), dtype=jnp.float32)
    out_big = jax.block_until_ready(dummy_model_forward(x_big, w1, b1, w2, b2))
    ref_big = jnp.maximum(x_big @ w1.T + b1, 0.0) @ w2.T + b2
    assert out_big.shape == (big_B, output_dim)
    assert jnp.allclose(out_big, ref_big, atol=1e-4, rtol=1e-4)

    print("KERNEL_OK")
</pallas_src>

<mosaic_0001>
module attributes {stable_mosaic.version = 11 : i64} {
  func.func @mlp_kernel(%arg0: memref<8x128xf32, #tpu.memory_space<vmem>>, %arg1: memref<64x128xf32, #tpu.memory_space<vmem>>, %arg2: memref<1x64xf32, #tpu.memory_space<vmem>>, %arg3: memref<128x64xf32, #tpu.memory_space<vmem>>, %arg4: memref<1x128xf32, #tpu.memory_space<vmem>>, %arg5: memref<8x128xf32, #tpu.memory_space<vmem>>) attributes {dimension_semantics = [], scalar_prefetch = 0 : i64, scratch_operands = 0 : i64, tpu.core_type = #tpu.core_type<tc>} {
    %c0 = arith.constant 0 : index
    %c0_0 = arith.constant 0 : index
    %0 = vector.load %arg0[%c0, %c0_0] : memref<8x128xf32, #tpu.memory_space<vmem>>, vector<8x128xf32>
    %c0_1 = arith.constant 0 : index
    %c0_2 = arith.constant 0 : index
    %1 = vector.load %arg1[%c0_1, %c0_2] : memref<64x128xf32, #tpu.memory_space<vmem>>, vector<64x128xf32>
    %cst = arith.constant dense<0.000000e+00> : vector<8x64xf32>
    %2 = tpu.matmul %0, %1, %cst {dimension_numbers = #tpu.dot_dimension_numbers<[1], [1], [0], [0], [0, 0, 1, 0], [], []>} : vector<8x128xf32>, vector<64x128xf32>, vector<8x64xf32> -> vector<8x64xf32>
    %c0_3 = arith.constant 0 : index
    %c0_4 = arith.constant 0 : index
    %3 = vector.load %arg2[%c0_3, %c0_4] : memref<1x64xf32, #tpu.memory_space<vmem>>, vector<1x64xf32>
    %4 = vector.broadcast %3 : vector<1x64xf32> to vector<8x64xf32>
    %5 = arith.addf %2, %4 : vector<8x64xf32>
    %cst_5 = arith.constant 0.000000e+00 : f32
    %6 = vector.broadcast %cst_5 : f32 to vector<8x64xf32>
    %7 = arith.maximumf %5, %6 : vector<8x64xf32>
    %c0_6 = arith.constant 0 : index
    %c0_7 = arith.constant 0 : index
    %8 = vector.load %arg3[%c0_6, %c0_7] : memref<128x64xf32, #tpu.memory_space<vmem>>, vector<128x64xf32>
    %cst_8 = arith.constant dense<0.000000e+00> : vector<8x128xf32>
    %9 = tpu.matmul %7, %8, %cst_8 {dimension_numbers = #tpu.dot_dimension_numbers<[1], [1], [0], [0], [0, 0, 1, 0], [], []>} : vector<8x64xf32>, vector<128x64xf32>, vector<8x128xf32> -> vector<8x128xf32>
    %c0_9 = arith.constant 0 : index
    %c0_10 = arith.constant 0 : index
    %10 = vector.load %arg4[%c0_9, %c0_10] : memref<1x128xf32, #tpu.memory_space<vmem>>, vector<1x128xf32>
    %11 = vector.broadcast %10 : vector<1x128xf32> to vector<8x128xf32>
    %12 = arith.addf %9, %11 : vector<8x128xf32>
    %c0_11 = arith.constant 0 : index
    %c0_12 = arith.constant 0 : index
    %13 = vector.load %arg5[%c0_11, %c0_12] : memref<8x128xf32, #tpu.memory_space<vmem>>, vector<8x128xf32>
    tpu.vector_store %arg5[%c0_11, %c0_12], %12 {strides = array<i32>} : memref<8x128xf32, #tpu.memory_space<vmem>>, vector<8x128xf32>,
    return
  }
}

</mosaic_0001>

<llo_original>
// kernel: tpu_custom_call.1
$region0: #{tpu_custom_call.1}
  #allocation0 [shape = 'u32[]', space=smem, size = 0x4, offset = 0x4, fixed_abs, tag = 'smem constant byte address 0x4 - core index']
  #allocation1 [shape = 'u32[144,128]{1,0:T(1,128)}', space=vmem, size = 0x12000, scoped, tag = 'internal scratch']
  %s0 = inlined_call_operand.vmem [shape: f32[8,128], index: 0, kind: input, shape index: {}]
  %s1 = inlined_call_operand.vmem [shape: f32[64,128], index: 1, kind: input, shape index: {}]
  %s2 = inlined_call_operand.vmem [shape: f32[1,64], index: 2, kind: input, shape index: {}]
  %s3 = inlined_call_operand.vmem [shape: f32[128,64], index: 3, kind: input, shape index: {}]
  %s4 = inlined_call_operand.vmem [shape: f32[1,128], index: 4, kind: input, shape index: {}]
  %s5 = inlined_call_operand.hbm [shape: f32[8,128], index: 5, kind: output, shape index: {}]
  %s6 = sld [smem:[#allocation0]]
  $region30: #{tpu_custom_call.1} parent=0
    _
  %s8 = ssub.s32 1, %s6
  %s9 = scalar_select 0, %s8, %s6
  $region1: #{tpu_custom_call.1} parent=0
    #allocation2 [shape = 'u8[4096]{0}', space=vmem, size = 0x1000, scoped, tag = 'output window, operand 0, single buffered']
    #allocation3 [shape = 's32[1]{0}', space=sflag, size = 0x4, scoped, tag = 'scoped memory for tpu_custom_call.1']
    %10 = vsyncpa [#allocation3], 0
    // Predicated region
    $region2: #{tpu_custom_call.1} parent=1 // pred_check
      _
    $region3: #{tpu_custom_call.1} parent=1 // pred_check_branch
      %12 = sbr.rel (0) target = $region5
    $region4: #{tpu_custom_call.1} parent=1 // pred_region
      _
    $region5: #{tpu_custom_call.1} parent=1 // pred_fallthru
      _
    // Predicated region
    $region6: #{tpu_custom_call.1} parent=1 // pred_check
      _
    $region7: #{tpu_custom_call.1} parent=1 // pred_check_branch
      %14 = sbr.rel (0) target = $region9
    $region8: #{tpu_custom_call.1} parent=1 // pred_region
      _
    $region9: #{tpu_custom_call.1} parent=1 // pred_fallthru
      _
    // Predicated region
    $region10: #{tpu_custom_call.1} parent=1 // pred_check
      _
    $region11: #{tpu_custom_call.1} parent=1 // pred_check_branch
      %16 = sbr.rel (0) target = $region13
    $region12: #{tpu_custom_call.1} parent=1 // pred_region
      _
    $region13: #{tpu_custom_call.1} parent=1 // pred_fallthru
      _
    // Predicated region
    $region14: #{tpu_custom_call.1} parent=1 // pred_check
      _
    $region15: #{tpu_custom_call.1} parent=1 // pred_check_branch
      %18 = sbr.rel (0) target = $region17
    $region16: #{tpu_custom_call.1} parent=1 // pred_region
      _
    $region17: #{tpu_custom_call.1} parent=1 // pred_fallthru
      _
    // Predicated region
    $region18: #{tpu_custom_call.1} parent=1 // pred_check
      _
    $region19: #{tpu_custom_call.1} parent=1 // pred_check_branch
      %20 = sbr.rel (0) target = $region21
    $region20: #{tpu_custom_call.1} parent=1 // pred_region
      _
    $region21: #{tpu_custom_call.1} parent=1 // pred_fallthru
      _
    %v21 = vld [vmem:[%s0] sm:$0xff]
    %v22 = vld [vmem:[%s1] sm:$0xff]
    %v23 = vld [vmem:[%s1 + $0x8] sm:$0xff]
    %v24 = vld [vmem:[%s1 + $0x10] sm:$0xff]
    %v25 = vld [vmem:[%s1 + $0x18] sm:$0xff]
    %v26 = vld [vmem:[%s1 + $0x20] sm:$0xff]
    %v27 = vld [vmem:[%s1 + $0x28] sm:$0xff]
    %v28 = vld [vmem:[%s1 + $0x30] sm:$0xff]
    %v29 = vld [vmem:[%s1 + $0x38] sm:$0xff]
    %v30 = vld [vmem:[%s2] sm:$0x1]
    %v32 = vlaneseq
    %v33 = vshrl.u32 %v32, 7
    %v34 = vsub.s32 0, %v33
    %v35 = vrot.slane %v30, %v34
    %37 = vmatprep.subr.mxu0 0.0
    %38 = vmatpush1.xpose.msra.mxu0 0.0
    %39 = vmatprep.subr.mxu0 0.0
    %40 = vmatpush1.xpose.msra.mxu0 0.0
    %41 = vmatprep.subr.mxu0 0.0
    %42 = vmatpush1.xpose.msra.mxu0 0.0
    %43 = vmatprep.subr.mxu0 0.0
    %44 = vmatpush1.xpose.msra.mxu0 0.0
    %45 = vmatprep.subr.mxu0 0.0
    %46 = vmatpush1.xpose.msra.mxu0 0.0
    %47 = vmatprep.subr.mxu0 0.0
    %48 = vmatpush1.xpose.msra.mxu0 0.0
    %49 = vmatprep.subr.mxu0 0.0
    %50 = vmatpush1.xpose.msra.mxu0 0.0
    %51 = vmatprep.subr.mxu0 0.0
    %52 = vmatpush1.xpose.msra.mxu0 0.0
    %53 = vmatprep.subr.mxu0 0.0
    %54 = vmatpush1.xpose.msra.mxu0 %v29
    %55 = vmatprep.subr.mxu0 0.0
    %56 = vmatpush1.xpose.msra.mxu0 %v28
    %57 = vmatprep.subr.mxu0 0.0
    %58 = vmatpush1.xpose.msra.mxu0 %v27
    %59 = vmatprep.subr.mxu0 0.0
    %60 = vmatpush1.xpose.msra.mxu0 %v26
    %61 = vmatprep.subr.mxu0 0.0
    %62 = vmatpush1.xpose.msra.mxu0 %v25
    %63 = vmatprep.subr.mxu0 0.0
    %64 = vmatpush1.xpose.msra.mxu0 %v24
    %65 = vmatprep.subr.mxu0 0.0
    %66 = vmatpush1.xpose.msra.mxu0 %v23
    %67 = vmatprep.subr.mxu0 0.0
    %68 = vmatpush1.xpose.msra.mxu0 %v22
    %69 = vmatprep.subr.mxu0 0.0
    %70 = vmatpush2.xpose.msra.mxu0 0.0
    %71 = vmatprep.subr.mxu0 0.0
    %72 = vmatpush2.xpose.msra.mxu0 0.0
    %73 = vmatprep.subr.mxu0 0.0
    %74 = vmatpush2.xpose.msra.mxu0 0.0
    %75 = vmatprep.subr.mxu0 0.0
    %76 = vmatpush2.xpose.msra.mxu0 0.0
    %77 = vmatprep.subr.mxu0 0.0
    %78 = vmatpush2.xpose.msra.mxu0 0.0
    %79 = vmatprep.subr.mxu0 0.0
    %80 = vmatpush2.xpose.msra.mxu0 0.0
    %81 = vmatprep.subr.mxu0 0.0
    %82 = vmatpush2.xpose.msra.mxu0 0.0
    %83 = vmatprep.subr.mxu0 0.0
    %84 = vmatpush2.xpose.msra.mxu0 0.0
    %85 = vmatprep.subr.mxu0 0.0
    %86 = vmatpush2.xpose.msra.mxu0 0.0
    %87 = vmatprep.subr.mxu0 0.0
    %88 = vmatpush2.xpose.msra.mxu0 0.0
    %89 = vmatprep.subr.mxu0 0.0
    %90 = vmatpush2.xpose.msra.mxu0 0.0
    %91 = vmatprep.subr.mxu0 0.0
    %92 = vmatpush2.xpose.msra.mxu0 0.0
    %93 = vmatprep.subr.mxu0 0.0
    %94 = vmatpush2.xpose.msra.mxu0 0.0
    %95 = vmatprep.subr.mxu0 0.0
    %96 = vmatpush2.xpose.msra.mxu0 0.0
    %97 = vmatprep.subr.mxu0 0.0
    %98 = vmatpush2.xpose.msra.mxu0 0.0
    %99 = vmatprep.subr.mxu0 0.0
    %100 = vmatpush2.xpose.msra.mxu0 0.0
    %101 = vmatprep.mubr.f32.mxu0 0.0
    %102 = vmatmul.mubr.f32.gmra.mxu0 %v21
    %v103 = vpop.f32.mrf.mxu0
    %v104 = vadd.f32 %v35, %v103
    %v105 = vpop.f32.mrf.mxu0
    %106 = vdwg.mxu0
    %v107 = vmax.f32 %v104, 0.0
    %v108 = vld [vmem:[%s3] sm:$0xff]
    %v109 = vld [vmem:[%s3 + $0x8] sm:$0xff]
    %v110 = vld [vmem:[%s3 + $0x10] sm:$0xff]
    %v111 = vld [vmem:[%s3 + $0x18] sm:$0xff]
    %v112 = vld [vmem:[%s3 + $0x20] sm:$0xff]
    %v113 = vld [vmem:[%s3 + $0x28] sm:$0xff]
    %v114 = vld [vmem:[%s3 + $0x30] sm:$0xff]
    %v115 = vld [vmem:[%s3 + $0x38] sm:$0xff]
    %v116 = vld [vmem:[%s3 + $0x40] sm:$0xff]
    %v117 = vld [vmem:[%s3 + $0x48] sm:$0xff]
    %v118 = vld [vmem:[%s3 + $0x50] sm:$0xff]
    %v119 = vld [vmem:[%s3 + $0x58] sm:$0xff]
    %v120 = vld [vmem:[%s3 + $0x60] sm:$0xff]
    %v121 = vld [vmem:[%s3 + $0x68] sm:$0xff]
    %v122 = vld [vmem:[%s3 + $0x70] sm:$0xff]
    %v123 = vld [vmem:[%s3 + $0x78] sm:$0xff]
    %v124 = vld [vmem:[%s4] sm:$0x1]
    %v126 = vlaneseq
    %v127 = vshrl.u32 %v126, 7
    %v128 = vsub.s32 0, %v127
    %v129 = vrot.slane %v124, %v128
    %vm131 = vcmask 523264
    %v133 = vsel %vm131, %v107, 0
    %v136 = vsel %vm131, %v108, 0
    %v139 = vsel %vm131, %v109, 0
    %v142 = vsel %vm131, %v110, 0
    %v145 = vsel %vm131, %v111, 0
    %v148 = vsel %vm131, %v112, 0
    %v151 = vsel %vm131, %v113, 0
    %v154 = vsel %vm131, %v114, 0
    %v157 = vsel %vm131, %v115, 0
    %v160 = vsel %vm131, %v116, 0
    %v163 = vsel %vm131, %v117, 0
    %v166 = vsel %vm131, %v118, 0
    %v169 = vsel %vm131, %v119, 0
    %v172 = vsel %vm131, %v120, 0
    %v175 = vsel %vm131, %v121, 0
    %v178 = vsel %vm131, %v122, 0
    %v181 = vsel %vm131, %v123, 0
    %183 = vmatprep.subr.mxu0 0.0
    %184 = vmatpush1.xpose.msra.mxu0 %v181
    %185 = vmatprep.subr.mxu0 0.0
    %186 = vmatpush1.xpose.msra.mxu0 %v178
    %187 = vmatprep.subr.mxu0 0.0
    %188 = vmatpush1.xpose.msra.mxu0 %v175
    %189 = vmatprep.subr.mxu0 0.0
    %190 = vmatpush1.xpose.msra.mxu0 %v172
    %191 = vmatprep.subr.mxu0 0.0
    %192 = vmatpush1.xpose.msra.mxu0 %v169
    %193 = vmatprep.subr.mxu0 0.0
    %194 = vmatpush1.xpose.msra.mxu0 %v166
    %195 = vmatprep.subr.mxu0 0.0
    %196 = vmatpush1.xpose.msra.mxu0 %v163
    %197 = vmatprep.subr.mxu0 0.0
    %198 = vmatpush1.xpose.msra.mxu0 %v160
    %199 = vmatprep.subr.mxu0 0.0
    %200 = vmatpush1.xpose.msra.mxu0 %v157
    %201 = vmatprep.subr.mxu0 0.0
    %202 = vmatpush1.xpose.msra.mxu0 %v154
    %203 = vmatprep.subr.mxu0 0.0
    %204 = vmatpush1.xpose.msra.mxu0 %v151
    %205 = vmatprep.subr.mxu0 0.0
    %206 = vmatpush1.xpose.msra.mxu0 %v148
    %207 = vmatprep.subr.mxu0 0.0
    %208 = vmatpush1.xpose.msra.mxu0 %v145
    %209 = vmatprep.subr.mxu0 0.0
    %210 = vmatpush1.xpose.msra.mxu0 %v142
    %211 = vmatprep.subr.mxu0 0.0
    %212 = vmatpush1.xpose.msra.mxu0 %v139
    %213 = vmatprep.subr.mxu0 0.0
    %214 = vmatpush1.xpose.msra.mxu0 %v136
    %215 = vmatprep.subr.mxu0 0.0
    %216 = vmatpush2.xpose.msra.mxu0 0.0
    %217 = vmatprep.subr.mxu0 0.0
    %218 = vmatpush2.xpose.msra.mxu0 0.0
    %219 = vmatprep.subr.mxu0 0.0
    %220 = vmatpush2.xpose.msra.mxu0 0.0
    %221 = vmatprep.subr.mxu0 0.0
    %222 = vmatpush2.xpose.msra.mxu0 0.0
    %223 = vmatprep.subr.mxu0 0.0
    %224 = vmatpush2.xpose.msra.mxu0 0.0
    %225 = vmatprep.subr.mxu0 0.0
    %226 = vmatpush2.xpose.msra.mxu0 0.0
    %227 = vmatprep.subr.mxu0 0.0
    %228 = vmatpush2.xpose.msra.mxu0 0.0
    %229 = vmatprep.subr.mxu0 0.0
    %230 = vmatpush2.xpose.msra.mxu0 0.0
    %231 = vmatprep.subr.mxu0 0.0
    %232 = vmatpush2.xpose.msra.mxu0 0.0
    %233 = vmatprep.subr.mxu0 0.0
    %234 = vmatpush2.xpose.msra.mxu0 0.0
    %235 = vmatprep.subr.mxu0 0.0
    %236 = vmatpush2.xpose.msra.mxu0 0.0
    %237 = vmatprep.subr.mxu0 0.0
    %238 = vmatpush2.xpose.msra.mxu0 0.0
    %239 = vmatprep.subr.mxu0 0.0
    %240 = vmatpush2.xpose.msra.mxu0 0.0
    %241 = vmatprep.subr.mxu0 0.0
    %242 = vmatpush2.xpose.msra.mxu0 0.0
    %243 = vmatprep.subr.mxu0 0.0
    %244 = vmatpush2.xpose.msra.mxu0 0.0
    %245 = vmatprep.subr.mxu0 0.0
    %246 = vmatpush2.xpose.msra.mxu0 0.0
    %247 = vmatprep.mubr.f32.mxu0 0.0
    %248 = vmatmul.mubr.f32.gmra.mxu0 %v133
    %v249 = vpop.f32.mrf.mxu0
    %v250 = vadd.f32 %v129, %v249
    %v251 = vpop.f32.mrf.mxu0
    %252 = vdwg.mxu0
    %253 = vst [vmem:[#allocation2] sm:$0xff] %v250
    // Predicated region
    $region22: #{tpu_custom_call.1} parent=1 // pred_check
      _
    $region23: #{tpu_custom_call.1} parent=1 // pred_check_branch
      %255 = sbr.rel (0) target = $region25
    $region24: #{tpu_custom_call.1} parent=1 // pred_region
      %s257 = ssub.s32 128, 128
      %258 = vsyncadd [#allocation3], %s257
      %s260 = sshll.u32 [#allocation2], 4
      %s261 = int_to_ptr.vmem [resolvable:$true] %s260
      %263 = dma.vmem_to_hbm [thread:$0]  %s261, 128, %s5, [#allocation3]
    $region25: #{tpu_custom_call.1} parent=1 // pred_fallthru
      _
    // Predicated region
    $region26: #{tpu_custom_call.1} parent=1 // pred_check
      _
    $region27: #{tpu_custom_call.1} parent=1 // pred_check_branch
      %265 = sbr.rel (0) target = $region29
    $region28: #{tpu_custom_call.1} parent=1 // pred_region
      %266 = dma.done [#allocation3], 128
    $region29: #{tpu_custom_call.1} parent=1 // pred_fallthru
      _
    %267 = vsyncpa [#allocation3], 1

</llo_original>
